<compile_context>
chip_gen: v7x
topology: tpu7x:2x2x1
jax: 0.10.0
libtpu: 0.0.40
codegen_flags: <defaults>
</compile_context>

<pallas_src>
import jax
import jax.numpy as jnp
from jax.experimental import pallas as pl
from jax.experimental.pallas import tpu as pltpu


def rnn_kernel(x_ref, h0_ref, w_ih_ref, b_ih_ref, b_hh_ref, w_hh_ref,
               w_out_ref, b_out_ref, out_ref, h_last_ref):
    """Whole sequence in one kernel invocation (no grid; everything VMEM-resident).

    Refs:
      x_ref      : (B, T, 1) VMEM  raw batch-first input
      h0_ref     : (B, H)    VMEM  initial hidden state
      w_ih_ref   : (1, H)    VMEM  W_ih^T row (input size I == 1)
      b_ih_ref   : (1, H)    VMEM
      b_hh_ref   : (1, H)    VMEM
      w_hh_ref   : (H, H)    VMEM  W_hh^T (pre-transposed so the step is h @ w_hh)
      w_out_ref  : (1, H)    VMEM  output projection weight (row vector)
      b_out_ref  : (1,)      SMEM  output projection bias (scalar path)
      out_ref    : (B, T)    VMEM  per-step outputs, written once at the end
      h_last_ref : (B, H)    VMEM  final hidden state
    """
    T = x_ref.shape[1]

    # Prologue: keep weights / fused bias resident across all steps (off the chain).
    w_ih = w_ih_ref[...]                       # (1, H)
    bias = b_ih_ref[...] + b_hh_ref[...]       # (1, H)  fused RNN biases
    w_hh = w_hh_ref[...]                       # (H, H)  already transposed
    w_out = w_out_ref[...]                     # (1, H)

    h = h0_ref[...]                            # (B, H)
    ys = []

    # Fully unrolled recurrence (T == 8).  Only tanh(pre_t + h @ W_hh^T) sits on the
    # sequential dependency chain; the per-step input/output projections depend only
    # on x / h_t and overlap with neighbouring steps under full unroll.
    # TODO(synk): for large T (>~64) switch to lax.fori_loop with a bounded unroll
    # factor and tile T with an "arbitrary" grid axis carrying h in scratch, so the
    # whole sequence need not be VMEM-resident (matters most on v7x's 64 MiB VMEM).
    for t in range(T):
        pre_t = x_ref[:, t, :] * w_ih + bias                           # (B,1)*(1,H)+(1,H) -> (B,H)
        h = jnp.tanh(pre_t + jnp.dot(h, w_hh,
                                     preferred_element_type=jnp.float32))
        # Output projection folded into the step: VPU mul + lane reduce (off the chain).
        ys.append(jnp.sum(h * w_out, axis=-1, keepdims=True))          # (B, 1)

    h_last_ref[...] = h.astype(h_last_ref.dtype)
    # Single bulk store of all per-step outputs as a lane-major (B, T) slab.
    y = jnp.concatenate(ys, axis=-1) + b_out_ref[0]                    # (B, T)
    out_ref[...] = y.astype(out_ref.dtype)


def rnn_forward(x, h_state, params):
    """Mirrors RNN.forward(x, h_state) of the PyTorch module.

    x       : (B, T, 1) float32  (batch_first)
    h_state : (1, B, H) float32 or None
    returns : (outs (B, T, 1), h_state (1, B, H))
    """
    w_ih, w_hh, b_ih, b_hh, w_out, b_out = (
        params["w_ih"], params["w_hh"], params["b_ih"], params["b_hh"],
        params["w_out"], params["b_out"])

    B, T, _ = x.shape
    H = w_hh.shape[0]

    if h_state is None:
        h0 = jnp.zeros((B, H), jnp.float32)
    else:
        h0 = h_state.reshape(B, H).astype(jnp.float32)

    # All reshapes below are contiguous (bitcasts); the only real wrapper ops left are
    # the tiny (H, H) weight transpose and the optional zeros init for h0.
    x_f = x.astype(jnp.float32)                             # (B, T, 1) passed raw
    w_ih_row = w_ih.reshape(1, H).astype(jnp.float32)       # W_ih^T (I == 1)
    b_ih_row = b_ih.reshape(1, H).astype(jnp.float32)
    b_hh_row = b_hh.reshape(1, H).astype(jnp.float32)
    w_hh_t = jnp.transpose(w_hh).astype(jnp.float32)        # (H, H)
    w_out_row = w_out.reshape(1, H).astype(jnp.float32)
    b_out_s = b_out.reshape(1).astype(jnp.float32)          # (1,) -> SMEM scalar

    vmem = pltpu.MemorySpace.VMEM
    smem = pltpu.MemorySpace.SMEM

    # NOTE: if throughput ever matters, pack more independent sequences into B
    # (pad to a multiple of 8 sublanes); per-step latency is ~independent of B
    # up to the MXU row count.  At B=2 a megacore/batch grid split is not worth it.
    out_bt, h_last = pl.pallas_call(
        rnn_kernel,
        out_shape=(jax.ShapeDtypeStruct((B, T), jnp.float32),
                   jax.ShapeDtypeStruct((B, H), jnp.float32)),
        in_specs=[
            pl.BlockSpec(memory_space=vmem),    # x        (B, T, 1)
            pl.BlockSpec(memory_space=vmem),    # h0       (B, H)
            pl.BlockSpec(memory_space=vmem),    # W_ih^T   (1, H)
            pl.BlockSpec(memory_space=vmem),    # b_ih     (1, H)
            pl.BlockSpec(memory_space=vmem),    # b_hh     (1, H)
            pl.BlockSpec(memory_space=vmem),    # W_hh^T   (H, H)
            pl.BlockSpec(memory_space=vmem),    # W_out    (1, H)
            pl.BlockSpec(memory_space=smem),    # b_out    (1,)
        ],
        out_specs=(
            pl.BlockSpec(memory_space=vmem),    # outs     (B, T)
            pl.BlockSpec(memory_space=vmem),    # h_last   (B, H)
        ),
    )(x_f, h0, w_ih_row, b_ih_row, b_hh_row, w_hh_t, w_out_row, b_out_s)

    outs = out_bt[:, :, None]                   # (B, T, 1) — free expand_dims
    return outs, h_last.reshape(1, B, H)


def rnn_reference(x, h_state, params):
    """Pure-JAX reference (lax.scan) matching torch.nn.RNN + per-step Linear."""
    w_ih, w_hh, b_ih, b_hh, w_out, b_out = (
        params["w_ih"], params["w_hh"], params["b_ih"], params["b_hh"],
        params["w_out"], params["b_out"])
    B = x.shape[0]
    H = w_hh.shape[0]
    h0 = jnp.zeros((B, H), jnp.float32) if h_state is None else h_state.reshape(B, H)

    def step(h, x_t):
        h_new = jnp.tanh(x_t @ w_ih.T + b_ih + h @ w_hh.T + b_hh)
        y = h_new @ w_out.T + b_out
        return h_new, y

    h_last, ys = jax.lax.scan(step, h0, jnp.transpose(x, (1, 0, 2)))
    return jnp.transpose(ys, (1, 0, 2)), h_last.reshape(1, B, H)


def init_params(key, input_size=1, hidden_size=32):
    """Deterministic init matching PyTorch parameter shapes:
       weight_ih_l0 (H, I), weight_hh_l0 (H, H), bias_ih_l0 (H,), bias_hh_l0 (H,),
       out.weight (1, H), out.bias (1,)."""
    ks = jax.random.split(key, 6)
    bound = 1.0 / jnp.sqrt(hidden_size)
    u = lambda k, shape: jax.random.uniform(k, shape, jnp.float32, -bound, bound)
    return {
        "w_ih": u(ks[0], (hidden_size, input_size)),
        "w_hh": u(ks[1], (hidden_size, hidden_size)),
        "b_ih": u(ks[2], (hidden_size,)),
        "b_hh": u(ks[3], (hidden_size,)),
        "w_out": u(ks[4], (1, hidden_size)),
        "b_out": u(ks[5], (1,)),
    }


if __name__ == "__main__":
    B, T, I, H = 2, 8, 1, 32

    key = jax.random.PRNGKey(0)
    k_params, k_x, k_h = jax.random.split(key, 3)

    params = init_params(k_params, input_size=I, hidden_size=H)
    x = jax.random.normal(k_x, (B, T, I), jnp.float32)
    h_state = jax.random.normal(k_h, (1, B, H), jnp.float32)

    rnn_forward_jit = jax.jit(rnn_forward)

    outs, h_new = rnn_forward_jit(x, h_state, params)
    outs = jax.block_until_ready(outs)
    h_new = jax.block_until_ready(h_new)

    # Sanity check against pure-JAX scan reference.
    outs_ref, h_ref = rnn_reference(x, h_state, params)
    assert outs.shape == (B, T, 1) and h_new.shape == (1, B, H)
    assert jnp.allclose(outs, outs_ref, atol=1e-5, rtol=1e-5)
    assert jnp.allclose(h_new, h_ref, atol=1e-5, rtol=1e-5)

    # Also exercise the h_state=None path (like the first call in the demo script).
    outs0, h0_out = rnn_forward_jit(x, None, params)
    outs0 = jax.block_until_ready(outs0)
    h0_out = jax.block_until_ready(h0_out)
    outs0_ref, h0_ref = rnn_reference(x, None, params)
    assert jnp.allclose(outs0, outs0_ref, atol=1e-5, rtol=1e-5)
    assert jnp.allclose(h0_out, h0_ref, atol=1e-5, rtol=1e-5)

    print("KERNEL_OK")
</pallas_src>

<mosaic_0001>
module attributes {stable_mosaic.version = 11 : i64} {
  func.func @rnn_kernel(%arg0: memref<2x8x1xf32, #tpu.memory_space<vmem>>, %arg1: memref<2x32xf32, #tpu.memory_space<vmem>>, %arg2: memref<1x32xf32, #tpu.memory_space<vmem>>, %arg3: memref<1x32xf32, #tpu.memory_space<vmem>>, %arg4: memref<1x32xf32, #tpu.memory_space<vmem>>, %arg5: memref<32x32xf32, #tpu.memory_space<vmem>>, %arg6: memref<1x32xf32, #tpu.memory_space<vmem>>, %arg7: memref<1xf32, #tpu.memory_space<smem>>, %arg8: memref<2x8xf32, #tpu.memory_space<vmem>>, %arg9: memref<2x32xf32, #tpu.memory_space<vmem>>) attributes {dimension_semantics = [], scalar_prefetch = 0 : i64, scratch_operands = 0 : i64, tpu.core_type = #tpu.core_type<tc>} {
    %c0 = arith.constant 0 : index
    %c0_0 = arith.constant 0 : index
    %0 = vector.load %arg2[%c0, %c0_0] : memref<1x32xf32, #tpu.memory_space<vmem>>, vector<1x32xf32>
    %c0_1 = arith.constant 0 : index
    %c0_2 = arith.constant 0 : index
    %1 = vector.load %arg3[%c0_1, %c0_2] : memref<1x32xf32, #tpu.memory_space<vmem>>, vector<1x32xf32>
    %c0_3 = arith.constant 0 : index
    %c0_4 = arith.constant 0 : index
    %2 = vector.load %arg4[%c0_3, %c0_4] : memref<1x32xf32, #tpu.memory_space<vmem>>, vector<1x32xf32>
    %3 = arith.addf %1, %2 : vector<1x32xf32>
    %c0_5 = arith.constant 0 : index
    %c0_6 = arith.constant 0 : index
    %4 = vector.load %arg5[%c0_5, %c0_6] : memref<32x32xf32, #tpu.memory_space<vmem>>, vector<32x32xf32>
    %c0_7 = arith.constant 0 : index
    %c0_8 = arith.constant 0 : index
    %5 = vector.load %arg6[%c0_7, %c0_8] : memref<1x32xf32, #tpu.memory_space<vmem>>, vector<1x32xf32>
    %c0_9 = arith.constant 0 : index
    %c0_10 = arith.constant 0 : index
    %6 = vector.load %arg1[%c0_9, %c0_10] : memref<2x32xf32, #tpu.memory_space<vmem>>, vector<2x32xf32>
    %c0_11 = arith.constant 0 : index
    %c0_12 = arith.constant 0 : index
    %c0_13 = arith.constant 0 : index
    %7 = vector.load %arg0[%c0_11, %c0_12, %c0_13] : memref<2x8x1xf32, #tpu.memory_space<vmem>>, vector<2x1x1xf32>
    %8 = vector.shape_cast %7 : vector<2x1x1xf32> to vector<2x1xf32>
    %9 = vector.broadcast %8 : vector<2x1xf32> to vector<2x32xf32>
    %10 = vector.broadcast %0 : vector<1x32xf32> to vector<2x32xf32>
    %11 = arith.mulf %9, %10 : vector<2x32xf32>
    %12 = vector.broadcast %3 : vector<1x32xf32> to vector<2x32xf32>
    %13 = arith.addf %11, %12 : vector<2x32xf32>
    %cst = arith.constant dense<0.000000e+00> : vector<2x32xf32>
    %14 = tpu.matmul %6, %4, %cst {dimension_numbers = #tpu.dot_dimension_numbers<[1], [0], [0], [1], [0, 0, 1, 1], [], []>} : vector<2x32xf32>, vector<32x32xf32>, vector<2x32xf32> -> vector<2x32xf32>
    %15 = arith.addf %13, %14 : vector<2x32xf32>
    %16 = math.tanh %15 : vector<2x32xf32>
    %17 = vector.broadcast %5 : vector<1x32xf32> to vector<2x32xf32>
    %18 = arith.mulf %16, %17 : vector<2x32xf32>
    %cst_14 = arith.constant dense<0.000000e+00> : vector<2xf32>
    %19 = vector.multi_reduction <add>, %18, %cst_14 [1] : vector<2x32xf32> to vector<2xf32>
    %20 = vector.shape_cast %19 : vector<2xf32> to vector<2x1xf32>
    %c0_15 = arith.constant 0 : index
    %c1 = arith.constant 1 : index
    %c0_16 = arith.constant 0 : index
    %21 = vector.load %arg0[%c0_15, %c1, %c0_16] : memref<2x8x1xf32, #tpu.memory_space<vmem>>, vector<2x1x1xf32>
    %22 = vector.shape_cast %21 : vector<2x1x1xf32> to vector<2x1xf32>
    %23 = vector.broadcast %22 : vector<2x1xf32> to vector<2x32xf32>
    %24 = vector.broadcast %0 : vector<1x32xf32> to vector<2x32xf32>
    %25 = arith.mulf %23, %24 : vector<2x32xf32>
    %26 = vector.broadcast %3 : vector<1x32xf32> to vector<2x32xf32>
    %27 = arith.addf %25, %26 : vector<2x32xf32>
    %cst_17 = arith.constant dense<0.000000e+00> : vector<2x32xf32>
    %28 = tpu.matmul %16, %4, %cst_17 {dimension_numbers = #tpu.dot_dimension_numbers<[1], [0], [0], [1], [0, 0, 1, 1], [], []>} : vector<2x32xf32>, vector<32x32xf32>, vector<2x32xf32> -> vector<2x32xf32>
    %29 = arith.addf %27, %28 : vector<2x32xf32>
    %30 = math.tanh %29 : vector<2x32xf32>
    %31 = vector.broadcast %5 : vector<1x32xf32> to vector<2x32xf32>
    %32 = arith.mulf %30, %31 : vector<2x32xf32>
    %cst_18 = arith.constant dense<0.000000e+00> : vector<2xf32>
    %33 = vector.multi_reduction <add>, %32, %cst_18 [1] : vector<2x32xf32> to vector<2xf32>
    %34 = vector.shape_cast %33 : vector<2xf32> to vector<2x1xf32>
    %c0_19 = arith.constant 0 : index
    %c2 = arith.constant 2 : index
    %c0_20 = arith.constant 0 : index
    %35 = vector.load %arg0[%c0_19, %c2, %c0_20] : memref<2x8x1xf32, #tpu.memory_space<vmem>>, vector<2x1x1xf32>
    %36 = vector.shape_cast %35 : vector<2x1x1xf32> to vector<2x1xf32>
    %37 = vector.broadcast %36 : vector<2x1xf32> to vector<2x32xf32>
    %38 = vector.broadcast %0 : vector<1x32xf32> to vector<2x32xf32>
    %39 = arith.mulf %37, %38 : vector<2x32xf32>
    %40 = vector.broadcast %3 : vector<1x32xf32> to vector<2x32xf32>
    %41 = arith.addf %39, %40 : vector<2x32xf32>
    %cst_21 = arith.constant dense<0.000000e+00> : vector<2x32xf32>
    %42 = tpu.matmul %30, %4, %cst_21 {dimension_numbers = #tpu.dot_dimension_numbers<[1], [0], [0], [1], [0, 0, 1, 1], [], []>} : vector<2x32xf32>, vector<32x32xf32>, vector<2x32xf32> -> vector<2x32xf32>
    %43 = arith.addf %41, %42 : vector<2x32xf32>
    %44 = math.tanh %43 : vector<2x32xf32>
    %45 = vector.broadcast %5 : vector<1x32xf32> to vector<2x32xf32>
    %46 = arith.mulf %44, %45 : vector<2x32xf32>
    %cst_22 = arith.constant dense<0.000000e+00> : vector<2xf32>
    %47 = vector.multi_reduction <add>, %46, %cst_22 [1] : vector<2x32xf32> to vector<2xf32>
    %48 = vector.shape_cast %47 : vector<2xf32> to vector<2x1xf32>
    %c0_23 = arith.constant 0 : index
    %c3 = arith.constant 3 : index
    %c0_24 = arith.constant 0 : index
    %49 = vector.load %arg0[%c0_23, %c3, %c0_24] : memref<2x8x1xf32, #tpu.memory_space<vmem>>, vector<2x1x1xf32>
    %50 = vector.shape_cast %49 : vector<2x1x1xf32> to vector<2x1xf32>
    %51 = vector.broadcast %50 : vector<2x1xf32> to vector<2x32xf32>
    %52 = vector.broadcast %0 : vector<1x32xf32> to vector<2x32xf32>
    %53 = arith.mulf %51, %52 : vector<2x32xf32>
    %54 = vector.broadcast %3 : vector<1x32xf32> to vector<2x32xf32>
    %55 = arith.addf %53, %54 : vector<2x32xf32>
    %cst_25 = arith.constant dense<0.000000e+00> : vector<2x32xf32>
    %56 = tpu.matmul %44, %4, %cst_25 {dimension_numbers = #tpu.dot_dimension_numbers<[1], [0], [0], [1], [0, 0, 1, 1], [], []>} : vector<2x32xf32>, vector<32x32xf32>, vector<2x32xf32> -> vector<2x32xf32>
    %57 = arith.addf %55, %56 : vector<2x32xf32>
    %58 = math.tanh %57 : vector<2x32xf32>
    %59 = vector.broadcast %5 : vector<1x32xf32> to vector<2x32xf32>
    %60 = arith.mulf %58, %59 : vector<2x32xf32>
    %cst_26 = arith.constant dense<0.000000e+00> : vector<2xf32>
    %61 = vector.multi_reduction <add>, %60, %cst_26 [1] : vector<2x32xf32> to vector<2xf32>
    %62 = vector.shape_cast %61 : vector<2xf32> to vector<2x1xf32>
    %c0_27 = arith.constant 0 : index
    %c4 = arith.constant 4 : index
    %c0_28 = arith.constant 0 : index
    %63 = vector.load %arg0[%c0_27, %c4, %c0_28] : memref<2x8x1xf32, #tpu.memory_space<vmem>>, vector<2x1x1xf32>
    %64 = vector.shape_cast %63 : vector<2x1x1xf32> to vector<2x1xf32>
    %65 = vector.broadcast %64 : vector<2x1xf32> to vector<2x32xf32>
    %66 = vector.broadcast %0 : vector<1x32xf32> to vector<2x32xf32>
    %67 = arith.mulf %65, %66 : vector<2x32xf32>
    %68 = vector.broadcast %3 : vector<1x32xf32> to vector<2x32xf32>
    %69 = arith.addf %67, %68 : vector<2x32xf32>
    %cst_29 = arith.constant dense<0.000000e+00> : vector<2x32xf32>
    %70 = tpu.matmul %58, %4, %cst_29 {dimension_numbers = #tpu.dot_dimension_numbers<[1], [0], [0], [1], [0, 0, 1, 1], [], []>} : vector<2x32xf32>, vector<32x32xf32>, vector<2x32xf32> -> vector<2x32xf32>
    %71 = arith.addf %69, %70 : vector<2x32xf32>
    %72 = math.tanh %71 : vector<2x32xf32>
    %73 = vector.broadcast %5 : vector<1x32xf32> to vector<2x32xf32>
    %74 = arith.mulf %72, %73 : vector<2x32xf32>
    %cst_30 = arith.constant dense<0.000000e+00> : vector<2xf32>
    %75 = vector.multi_reduction <add>, %74, %cst_30 [1] : vector<2x32xf32> to vector<2xf32>
    %76 = vector.shape_cast %75 : vector<2xf32> to vector<2x1xf32>
    %c0_31 = arith.constant 0 : index
    %c5 = arith.constant 5 : index
    %c0_32 = arith.constant 0 : index
    %77 = vector.load %arg0[%c0_31, %c5, %c0_32] : memref<2x8x1xf32, #tpu.memory_space<vmem>>, vector<2x1x1xf32>
    %78 = vector.shape_cast %77 : vector<2x1x1xf32> to vector<2x1xf32>
    %79 = vector.broadcast %78 : vector<2x1xf32> to vector<2x32xf32>
    %80 = vector.broadcast %0 : vector<1x32xf32> to vector<2x32xf32>
    %81 = arith.mulf %79, %80 : vector<2x32xf32>
    %82 = vector.broadcast %3 : vector<1x32xf32> to vector<2x32xf32>
    %83 = arith.addf %81, %82 : vector<2x32xf32>
    %cst_33 = arith.constant dense<0.000000e+00> : vector<2x32xf32>
    %84 = tpu.matmul %72, %4, %cst_33 {dimension_numbers = #tpu.dot_dimension_numbers<[1], [0], [0], [1], [0, 0, 1, 1], [], []>} : vector<2x32xf32>, vector<32x32xf32>, vector<2x32xf32> -> vector<2x32xf32>
    %85 = arith.addf %83, %84 : vector<2x32xf32>
    %86 = math.tanh %85 : vector<2x32xf32>
    %87 = vector.broadcast %5 : vector<1x32xf32> to vector<2x32xf32>
    %88 = arith.mulf %86, %87 : vector<2x32xf32>
    %cst_34 = arith.constant dense<0.000000e+00> : vector<2xf32>
    %89 = vector.multi_reduction <add>, %88, %cst_34 [1] : vector<2x32xf32> to vector<2xf32>
    %90 = vector.shape_cast %89 : vector<2xf32> to vector<2x1xf32>
    %c0_35 = arith.constant 0 : index
    %c6 = arith.constant 6 : index
    %c0_36 = arith.constant 0 : index
    %91 = vector.load %arg0[%c0_35, %c6, %c0_36] : memref<2x8x1xf32, #tpu.memory_space<vmem>>, vector<2x1x1xf32>
    %92 = vector.shape_cast %91 : vector<2x1x1xf32> to vector<2x1xf32>
    %93 = vector.broadcast %92 : vector<2x1xf32> to vector<2x32xf32>
    %94 = vector.broadcast %0 : vector<1x32xf32> to vector<2x32xf32>
    %95 = arith.mulf %93, %94 : vector<2x32xf32>
    %96 = vector.broadcast %3 : vector<1x32xf32> to vector<2x32xf32>
    %97 = arith.addf %95, %96 : vector<2x32xf32>
    %cst_37 = arith.constant dense<0.000000e+00> : vector<2x32xf32>
    %98 = tpu.matmul %86, %4, %cst_37 {dimension_numbers = #tpu.dot_dimension_numbers<[1], [0], [0], [1], [0, 0, 1, 1], [], []>} : vector<2x32xf32>, vector<32x32xf32>, vector<2x32xf32> -> vector<2x32xf32>
    %99 = arith.addf %97, %98 : vector<2x32xf32>
    %100 = math.tanh %99 : vector<2x32xf32>
    %101 = vector.broadcast %5 : vector<1x32xf32> to vector<2x32xf32>
    %102 = arith.mulf %100, %101 : vector<2x32xf32>
    %cst_38 = arith.constant dense<0.000000e+00> : vector<2xf32>
    %103 = vector.multi_reduction <add>, %102, %cst_38 [1] : vector<2x32xf32> to vector<2xf32>
    %104 = vector.shape_cast %103 : vector<2xf32> to vector<2x1xf32>
    %c0_39 = arith.constant 0 : index
    %c7 = arith.constant 7 : index
    %c0_40 = arith.constant 0 : index
    %105 = vector.load %arg0[%c0_39, %c7, %c0_40] : memref<2x8x1xf32, #tpu.memory_space<vmem>>, vector<2x1x1xf32>
    %106 = vector.shape_cast %105 : vector<2x1x1xf32> to vector<2x1xf32>
    %107 = vector.broadcast %106 : vector<2x1xf32> to vector<2x32xf32>
    %108 = vector.broadcast %0 : vector<1x32xf32> to vector<2x32xf32>
    %109 = arith.mulf %107, %108 : vector<2x32xf32>
    %110 = vector.broadcast %3 : vector<1x32xf32> to vector<2x32xf32>
    %111 = arith.addf %109, %110 : vector<2x32xf32>
    %cst_41 = arith.constant dense<0.000000e+00> : vector<2x32xf32>
    %112 = tpu.matmul %100, %4, %cst_41 {dimension_numbers = #tpu.dot_dimension_numbers<[1], [0], [0], [1], [0, 0, 1, 1], [], []>} : vector<2x32xf32>, vector<32x32xf32>, vector<2x32xf32> -> vector<2x32xf32>
    %113 = arith.addf %111, %112 : vector<2x32xf32>
    %114 = math.tanh %113 : vector<2x32xf32>
    %115 = vector.broadcast %5 : vector<1x32xf32> to vector<2x32xf32>
    %116 = arith.mulf %114, %115 : vector<2x32xf32>
    %cst_42 = arith.constant dense<0.000000e+00> : vector<2xf32>
    %117 = vector.multi_reduction <add>, %116, %cst_42 [1] : vector<2x32xf32> to vector<2xf32>
    %118 = vector.shape_cast %117 : vector<2xf32> to vector<2x1xf32>
    %c0_43 = arith.constant 0 : index
    %c0_44 = arith.constant 0 : index
    %119 = vector.load %arg9[%c0_43, %c0_44] : memref<2x32xf32, #tpu.memory_space<vmem>>, vector<2x32xf32>
    tpu.vector_store %arg9[%c0_43, %c0_44], %114 {strides = array<i32>} : memref<2x32xf32, #tpu.memory_space<vmem>>, vector<2x32xf32>,
    %120 = tpu.concatenate %20, %34, %48, %62, %76, %90, %104, %118 in 1 : vector<2x1xf32>, vector<2x1xf32>, vector<2x1xf32>, vector<2x1xf32>, vector<2x1xf32>, vector<2x1xf32>, vector<2x1xf32>, vector<2x1xf32> -> vector<2x8xf32>
    %c0_45 = arith.constant 0 : index
    %121 = memref.load %arg7[%c0_45] : memref<1xf32, #tpu.memory_space<smem>>
    %122 = vector.broadcast %121 : f32 to vector<2x8xf32>
    %123 = arith.addf %120, %122 : vector<2x8xf32>
    %c0_46 = arith.constant 0 : index
    %c0_47 = arith.constant 0 : index
    %124 = vector.load %arg8[%c0_46, %c0_47] : memref<2x8xf32, #tpu.memory_space<vmem>>, vector<2x8xf32>
    tpu.vector_store %arg8[%c0_46, %c0_47], %123 {strides = array<i32>} : memref<2x8xf32, #tpu.memory_space<vmem>>, vector<2x8xf32>,
    return
  }
}

</mosaic_0001>

<llo_original>
// kernel: rnn_forward.1
$region0: #{rnn_forward.1}
  #allocation0 [shape = 'u32[]', space=smem, size = 0x4, offset = 0x4, fixed_abs, tag = 'smem constant byte address 0x4 - core index']
  #allocation1 [shape = 'u32[144,128]{1,0:T(1,128)}', space=vmem, size = 0x12000, scoped, tag = 'internal scratch']
  #allocation2 [shape = 'f32[1]{0:T(128)S(6)}', space=smem, size = 0x200, scoped, tag = 'scoped memory for rnn_forward.1']
  %s0 = inlined_call_operand.vmem [shape: f32[2,8,1], index: 0, kind: input, shape index: {}]
  %s1 = inlined_call_operand.vmem [shape: f32[2,32], index: 1, kind: input, shape index: {}]
  %s2 = inlined_call_operand.vmem [shape: f32[1,32], index: 2, kind: input, shape index: {}]
  %s3 = inlined_call_operand.vmem [shape: f32[1,32], index: 3, kind: input, shape index: {}]
  %s4 = inlined_call_operand.vmem [shape: f32[1,32], index: 4, kind: input, shape index: {}]
  %s5 = inlined_call_operand.vmem [shape: f32[32,32], index: 5, kind: input, shape index: {}]
  %s6 = inlined_call_operand.vmem [shape: f32[1,32], index: 6, kind: input, shape index: {}]
  %s7 = inlined_call_operand.<no memory space> [shape: f32[1], index: 7, kind: input, shape index: {}]
  %s8 = inlined_call_operand.hbm [shape: f32[2,8], index: 8, kind: output, shape index: {0}]
  %s9 = inlined_call_operand.hbm [shape: f32[2,32], index: 9, kind: output, shape index: {1}]
  %10 = xla_tuple %s8, %s9
  %s11 = sld [smem:[#allocation0]]
  $region50: #{rnn_forward.1} parent=0
    _
  %s13 = ssub.s32 1, %s11
  %s14 = scalar_select 0, %s13, %s11
  %15 = sst [smem:[#allocation2]] %s7
  $region1: #{rnn_forward.1} parent=0
    #allocation3 [shape = 'u8[1024]{0}', space=vmem, size = 0x400, scoped, tag = 'output window, operand 0, single buffered']
    #allocation4 [shape = 's32[1]{0}', space=sflag, size = 0x4, scoped, tag = 'scoped memory for rnn_forward.1']
    #allocation5 [shape = 'u8[1024]{0}', space=vmem, size = 0x400, scoped, tag = 'output window, operand 1, single buffered']
    #allocation6 [shape = 's32[1]{0}', space=sflag, size = 0x4, scoped, tag = 'scoped memory for rnn_forward.1']
    %16 = vsyncpa [#allocation4], 0
    %17 = vsyncpa [#allocation6], 0
    // Predicated region
    $region2: #{rnn_forward.1} parent=1 // pred_check
      _
    $region3: #{rnn_forward.1} parent=1 // pred_check_branch
      %19 = sbr.rel (0) target = $region5
    $region4: #{rnn_forward.1} parent=1 // pred_region
      _
    $region5: #{rnn_forward.1} parent=1 // pred_fallthru
      _
    // Predicated region
    $region6: #{rnn_forward.1} parent=1 // pred_check
      _
    $region7: #{rnn_forward.1} parent=1 // pred_check_branch
      %21 = sbr.rel (0) target = $region9
    $region8: #{rnn_forward.1} parent=1 // pred_region
      _
    $region9: #{rnn_forward.1} parent=1 // pred_fallthru
      _
    // Predicated region
    $region10: #{rnn_forward.1} parent=1 // pred_check
      _
    $region11: #{rnn_forward.1} parent=1 // pred_check_branch
      %23 = sbr.rel (0) target = $region13
    $region12: #{rnn_forward.1} parent=1 // pred_region
      _
    $region13: #{rnn_forward.1} parent=1 // pred_fallthru
      _
    // Predicated region
    $region14: #{rnn_forward.1} parent=1 // pred_check
      _
    $region15: #{rnn_forward.1} parent=1 // pred_check_branch
      %25 = sbr.rel (0) target = $region17
    $region16: #{rnn_forward.1} parent=1 // pred_region
      _
    $region17: #{rnn_forward.1} parent=1 // pred_fallthru
      _
    // Predicated region
    $region18: #{rnn_forward.1} parent=1 // pred_check
      _
    $region19: #{rnn_forward.1} parent=1 // pred_check_branch
      %27 = sbr.rel (0) target = $region21
    $region20: #{rnn_forward.1} parent=1 // pred_region
      _
    $region21: #{rnn_forward.1} parent=1 // pred_fallthru
      _
    // Predicated region
    $region22: #{rnn_forward.1} parent=1 // pred_check
      _
    $region23: #{rnn_forward.1} parent=1 // pred_check_branch
      %29 = sbr.rel (0) target = $region25
    $region24: #{rnn_forward.1} parent=1 // pred_region
      _
    $region25: #{rnn_forward.1} parent=1 // pred_fallthru
      _
    // Predicated region
    $region26: #{rnn_forward.1} parent=1 // pred_check
      _
    $region27: #{rnn_forward.1} parent=1 // pred_check_branch
      %31 = sbr.rel (0) target = $region29
    $region28: #{rnn_forward.1} parent=1 // pred_region
      _
    $region29: #{rnn_forward.1} parent=1 // pred_fallthru
      _
    // Predicated region
    $region30: #{rnn_forward.1} parent=1 // pred_check
      _
    $region31: #{rnn_forward.1} parent=1 // pred_check_branch
      %33 = sbr.rel (0) target = $region33
    $region32: #{rnn_forward.1} parent=1 // pred_region
      _
    $region33: #{rnn_forward.1} parent=1 // pred_fallthru
      _
    %v34 = vld [vmem:[%s2] sm:$0x1]
    %v35 = vld [vmem:[%s3] sm:$0x1]
    %v36 = vld [vmem:[%s4] sm:$0x1]
    %v37 = vadd.f32 %v35, %v36
    %v38 = vld [vmem:[%s5] sm:$0xff]
    %v39 = vld [vmem:[%s5 + $0x8] sm:$0xff]
    %v40 = vld [vmem:[%s5 + $0x10] sm:$0xff]
    %v41 = vld [vmem:[%s5 + $0x18] sm:$0xff]
    %v42 = vld [vmem:[%s6] sm:$0x1]
    %v43 = vld [vmem:[%s1] sm:$0x3]
    %v44 = vld [vmem:[%s0] sm:$0x1]
    %v45 = vld [vmem:[%s0 + $0x8] sm:$0x1]
    %47 = vset.pattern.permute.xlu0 0
    %48 = vperm.xlu0 %47, %v44
    %v49 = vpop.permute.xlu0 %48
    %52 = vset.pattern.permute.xlu0 0
    %53 = vperm.xlu0 %52, %v45
    %v54 = vpop.permute.xlu0 %53
    %v57 = vlaneseq
    %v58 = vshrl.u32 %v57, 7
    %v59 = vsub.s32 0, %v58
    %v60 = vrot.slane %v34, %v59
    %v62 = vmul.f32 %v49, %v60
    %v63 = vmul.f32 %v54, %v60
    %v65 = vlaneseq
    %v66 = vshrl.u32 %v65, 7
    %v67 = vsub.s32 0, %v66
    %v68 = vrot.slane %v37, %v67
    %v70 = vadd.f32 %v62, %v68
    %v71 = vadd.f32 %v63, %v68
    %vm72 = vcmask 261120
    %v74 = vsel %vm72, %v43, 0
    %76 = vmatprep.subr.mxu0 0.0
    %77 = vmatpush1.msra.mxu0 %v38
    %78 = vmatprep.subr.mxu0 0.0
    %79 = vmatpush1.msra.mxu0 %v39
    %80 = vmatprep.subr.mxu0 0.0
    %81 = vmatpush1.msra.mxu0 %v40
    %82 = vmatprep.subr.mxu0 0.0
    %83 = vmatpush1.msra.mxu0 %v41
    %84 = vmatprep.subr.mxu0 0.0
    %85 = vmatpush1.msra.mxu0 0.0
    %86 = vmatprep.subr.mxu0 0.0
    %87 = vmatpush1.msra.mxu0 0.0
    %88 = vmatprep.subr.mxu0 0.0
    %89 = vmatpush1.msra.mxu0 0.0
    %90 = vmatprep.subr.mxu0 0.0
    %91 = vmatpush1.msra.mxu0 0.0
    %92 = vmatprep.subr.mxu0 0.0
    %93 = vmatpush1.msra.mxu0 0.0
    %94 = vmatprep.subr.mxu0 0.0
    %95 = vmatpush1.msra.mxu0 0.0
    %96 = vmatprep.subr.mxu0 0.0
    %97 = vmatpush1.msra.mxu0 0.0
    %98 = vmatprep.subr.mxu0 0.0
    %99 = vmatpush1.msra.mxu0 0.0
    %100 = vmatprep.subr.mxu0 0.0
    %101 = vmatpush1.msra.mxu0 0.0
    %102 = vmatprep.subr.mxu0 0.0
    %103 = vmatpush1.msra.mxu0 0.0
    %104 = vmatprep.subr.mxu0 0.0
    %105 = vmatpush1.msra.mxu0 0.0
    %106 = vmatprep.subr.mxu0 0.0
    %107 = vmatpush1.msra.mxu0 0.0
    %108 = vmatprep.subr.mxu0 0.0
    %109 = vmatpush1.msra.mxu0 0.0
    %110 = vmatprep.subr.mxu0 0.0
    %111 = vmatpush1.msra.mxu0 0.0
    %112 = vmatprep.subr.mxu0 0.0
    %113 = vmatpush1.msra.mxu0 0.0
    %114 = vmatprep.subr.mxu0 0.0
    %115 = vmatpush1.msra.mxu0 0.0
    %116 = vmatprep.subr.mxu0 0.0
    %117 = vmatpush1.msra.mxu0 0.0
    %118 = vmatprep.subr.mxu0 0.0
    %119 = vmatpush1.msra.mxu0 0.0
    %120 = vmatprep.subr.mxu0 0.0
    %121 = vmatpush1.msra.mxu0 0.0
    %122 = vmatprep.subr.mxu0 0.0
    %123 = vmatpush1.msra.mxu0 0.0
    %124 = vmatprep.subr.mxu0 0.0
    %125 = vmatpush1.msra.mxu0 0.0
    %126 = vmatprep.subr.mxu0 0.0
    %127 = vmatpush1.msra.mxu0 0.0
    %128 = vmatprep.subr.mxu0 0.0
    %129 = vmatpush1.msra.mxu0 0.0
    %130 = vmatprep.subr.mxu0 0.0
    %131 = vmatpush1.msra.mxu0 0.0
    %132 = vmatprep.subr.mxu0 0.0
    %133 = vmatpush1.msra.mxu0 0.0
    %134 = vmatprep.subr.mxu0 0.0
    %135 = vmatpush1.msra.mxu0 0.0
    %136 = vmatprep.subr.mxu0 0.0
    %137 = vmatpush1.msra.mxu0 0.0
    %138 = vmatprep.subr.mxu0 0.0
    %139 = vmatpush1.msra.mxu0 0.0
    %140 = vmatprep.mubr.f32.mxu0 0.0
    %141 = vmatmul.mubr.f32.gmra.mrb[0].mxu0 %v74
    %v142 = vpop.f32.mrb[0].mxu0
    %v143 = vadd.f32 0.0, %v142
    %v144 = vpop.f32.mrb[0].mxu0
    %145 = vdwg.mxu0
    %v147 = vrot.slane %v143, 1
    %v150 = vadd.f32 %v70, %v143
    %v151 = vadd.f32 %v71, %v147
    %v152 = vtanh.pop %v150
    %v153 = vtanh.pop %v151
    %v155 = vlaneseq
    %v156 = vshrl.u32 %v155, 7
    %v157 = vsub.s32 0, %v156
    %v158 = vrot.slane %v42, %v157
    %v160 = vmul.f32 %v152, %v158
    %v161 = vmul.f32 %v153, %v158
    %v164 = vrot.slane %v161, 7
    %vm165 = vcmask 1041409
    %v166 = vsel %vm165, %v164, %v160
    %vm168 = vcmask 254976
    %v169 = vsel %vm168, %v166, 0.0
    %170 = vadd.xlane.f32.xlu0 %v169
    %v171 = vpop.xlane.xlu0 %170
    %v172 = vld [vmem:[%s0 + $0x1] sm:$0x1]
    %v173 = vld [vmem:[%s0 + $0x9] sm:$0x1]
    %175 = vset.pattern.permute.xlu0 0
    %176 = vperm.xlu0 %175, %v172
    %v177 = vpop.permute.xlu0 %176
    %180 = vset.pattern.permute.xlu0 0
    %181 = vperm.xlu0 %180, %v173
    %v182 = vpop.permute.xlu0 %181
    %v184 = vmul.f32 %v177, %v60
    %v185 = vmul.f32 %v182, %v60
    %v186 = vadd.f32 %v184, %v68
    %v187 = vadd.f32 %v185, %v68
    %v190 = vrot.slane %v153, 7
    %v191 = vsel %vm165, %v190, %v152
    %v192 = vsel %vm72, %v191, 0
    %194 = vmatprep.subr.mxu0 0.0
    %195 = vmatpush1.msra.mxu0 %v38
    %196 = vmatprep.subr.mxu0 0.0
    %197 = vmatpush1.msra.mxu0 %v39
    %198 = vmatprep.subr.mxu0 0.0
    %199 = vmatpush1.msra.mxu0 %v40
    %200 = vmatprep.subr.mxu0 0.0
    %201 = vmatpush1.msra.mxu0 %v41
    %202 = vmatprep.subr.mxu0 0.0
    %203 = vmatpush1.msra.mxu0 0.0
    %204 = vmatprep.subr.mxu0 0.0
    %205 = vmatpush1.msra.mxu0 0.0
    %206 = vmatprep.subr.mxu0 0.0
    %207 = vmatpush1.msra.mxu0 0.0
    %208 = vmatprep.subr.mxu0 0.0
    %209 = vmatpush1.msra.mxu0 0.0
    %210 = vmatprep.subr.mxu0 0.0
    %211 = vmatpush1.msra.mxu0 0.0
    %212 = vmatprep.subr.mxu0 0.0
    %213 = vmatpush1.msra.mxu0 0.0
    %214 = vmatprep.subr.mxu0 0.0
    %215 = vmatpush1.msra.mxu0 0.0
    %216 = vmatprep.subr.mxu0 0.0
    %217 = vmatpush1.msra.mxu0 0.0
    %218 = vmatprep.subr.mxu0 0.0
    %219 = vmatpush1.msra.mxu0 0.0
    %220 = vmatprep.subr.mxu0 0.0
    %221 = vmatpush1.msra.mxu0 0.0
    %222 = vmatprep.subr.mxu0 0.0
    %223 = vmatpush1.msra.mxu0 0.0
    %224 = vmatprep.subr.mxu0 0.0
    %225 = vmatpush1.msra.mxu0 0.0
    %226 = vmatprep.subr.mxu0 0.0
    %227 = vmatpush1.msra.mxu0 0.0
    %228 = vmatprep.subr.mxu0 0.0
    %229 = vmatpush1.msra.mxu0 0.0
    %230 = vmatprep.subr.mxu0 0.0
    %231 = vmatpush1.msra.mxu0 0.0
    %232 = vmatprep.subr.mxu0 0.0
    %233 = vmatpush1.msra.mxu0 0.0
    %234 = vmatprep.subr.mxu0 0.0
    %235 = vmatpush1.msra.mxu0 0.0
    %236 = vmatprep.subr.mxu0 0.0
    %237 = vmatpush1.msra.mxu0 0.0
    %238 = vmatprep.subr.mxu0 0.0
    %239 = vmatpush1.msra.mxu0 0.0
    %240 = vmatprep.subr.mxu0 0.0
    %241 = vmatpush1.msra.mxu0 0.0
    %242 = vmatprep.subr.mxu0 0.0
    %243 = vmatpush1.msra.mxu0 0.0
    %244 = vmatprep.subr.mxu0 0.0
    %245 = vmatpush1.msra.mxu0 0.0
    %246 = vmatprep.subr.mxu0 0.0
    %247 = vmatpush1.msra.mxu0 0.0
    %248 = vmatprep.subr.mxu0 0.0
    %249 = vmatpush1.msra.mxu0 0.0
    %250 = vmatprep.subr.mxu0 0.0
    %251 = vmatpush1.msra.mxu0 0.0
    %252 = vmatprep.subr.mxu0 0.0
    %253 = vmatpush1.msra.mxu0 0.0
    %254 = vmatprep.subr.mxu0 0.0
    %255 = vmatpush1.msra.mxu0 0.0
    %256 = vmatprep.subr.mxu0 0.0
    %257 = vmatpush1.msra.mxu0 0.0
    %258 = vmatprep.mubr.f32.mxu0 0.0
    %259 = vmatmul.mubr.f32.gmra.mrb[0].mxu0 %v192
    %v260 = vpop.f32.mrb[0].mxu0
    %v261 = vadd.f32 0.0, %v260
    %v262 = vpop.f32.mrb[0].mxu0
    %263 = vdwg.mxu0
    %v265 = vrot.slane %v261, 1
    %v268 = vadd.f32 %v186, %v261
    %v269 = vadd.f32 %v187, %v265
    %v270 = vtanh.pop %v268
    %v271 = vtanh.pop %v269
    %v272 = vmul.f32 %v270, %v158
    %v273 = vmul.f32 %v271, %v158
    %v276 = vrot.slane %v273, 7
    %v277 = vsel %vm165, %v276, %v272
    %v279 = vsel %vm168, %v277, 0.0
    %280 = vadd.xlane.f32.xlu0 %v279
    %v281 = vpop.xlane.xlu0 %280
    %v282 = vld [vmem:[%s0 + $0x2] sm:$0x1]
    %v283 = vld [vmem:[%s0 + $0xa] sm:$0x1]
    %285 = vset.pattern.permute.xlu0 0
    %286 = vperm.xlu0 %285, %v282
    %v287 = vpop.permute.xlu0 %286
    %290 = vset.pattern.permute.xlu0 0
    %291 = vperm.xlu0 %290, %v283
    %v292 = vpop.permute.xlu0 %291
    %v294 = vmul.f32 %v287, %v60
    %v295 = vmul.f32 %v292, %v60
    %v296 = vadd.f32 %v294, %v68
    %v297 = vadd.f32 %v295, %v68
    %v300 = vrot.slane %v271, 7
    %v301 = vsel %vm165, %v300, %v270
    %v302 = vsel %vm72, %v301, 0
    %304 = vmatprep.subr.mxu0 0.0
    %305 = vmatpush1.msra.mxu0 %v38
    %306 = vmatprep.subr.mxu0 0.0
    %307 = vmatpush1.msra.mxu0 %v39
    %308 = vmatprep.subr.mxu0 0.0
    %309 = vmatpush1.msra.mxu0 %v40
    %310 = vmatprep.subr.mxu0 0.0
    %311 = vmatpush1.msra.mxu0 %v41
    %312 = vmatprep.subr.mxu0 0.0
    %313 = vmatpush1.msra.mxu0 0.0
    %314 = vmatprep.subr.mxu0 0.0
    %315 = vmatpush1.msra.mxu0 0.0
    %316 = vmatprep.subr.mxu0 0.0
    %317 = vmatpush1.msra.mxu0 0.0
    %318 = vmatprep.subr.mxu0 0.0
    %319 = vmatpush1.msra.mxu0 0.0
    %320 = vmatprep.subr.mxu0 0.0
    %321 = vmatpush1.msra.mxu0 0.0
    %322 = vmatprep.subr.mxu0 0.0
    %323 = vmatpush1.msra.mxu0 0.0
    %324 = vmatprep.subr.mxu0 0.0
    %325 = vmatpush1.msra.mxu0 0.0
    %326 = vmatprep.subr.mxu0 0.0
    %327 = vmatpush1.msra.mxu0 0.0
    %328 = vmatprep.subr.mxu0 0.0
    %329 = vmatpush1.msra.mxu0 0.0
    %330 = vmatprep.subr.mxu0 0.0
    %331 = vmatpush1.msra.mxu0 0.0
    %332 = vmatprep.subr.mxu0 0.0
    %333 = vmatpush1.msra.mxu0 0.0
    %334 = vmatprep.subr.mxu0 0.0
    %335 = vmatpush1.msra.mxu0 0.0
    %336 = vmatprep.subr.mxu0 0.0
    %337 = vmatpush1.msra.mxu0 0.0
    %338 = vmatprep.subr.mxu0 0.0
    %339 = vmatpush1.msra.mxu0 0.0
    %340 = vmatprep.subr.mxu0 0.0
    %341 = vmatpush1.msra.mxu0 0.0
    %342 = vmatprep.subr.mxu0 0.0
    %343 = vmatpush1.msra.mxu0 0.0
    %344 = vmatprep.subr.mxu0 0.0
    %345 = vmatpush1.msra.mxu0 0.0
    %346 = vmatprep.subr.mxu0 0.0
    %347 = vmatpush1.msra.mxu0 0.0
    %348 = vmatprep.subr.mxu0 0.0
    %349 = vmatpush1.msra.mxu0 0.0
    %350 = vmatprep.subr.mxu0 0.0
    %351 = vmatpush1.msra.mxu0 0.0
    %352 = vmatprep.subr.mxu0 0.0
    %353 = vmatpush1.msra.mxu0 0.0
    %354 = vmatprep.subr.mxu0 0.0
    %355 = vmatpush1.msra.mxu0 0.0
    %356 = vmatprep.subr.mxu0 0.0
    %357 = vmatpush1.msra.mxu0 0.0
    %358 = vmatprep.subr.mxu0 0.0
    %359 = vmatpush1.msra.mxu0 0.0
    %360 = vmatprep.subr.mxu0 0.0
    %361 = vmatpush1.msra.mxu0 0.0
    %362 = vmatprep.subr.mxu0 0.0
    %363 = vmatpush1.msra.mxu0 0.0
    %364 = vmatprep.subr.mxu0 0.0
    %365 = vmatpush1.msra.mxu0 0.0
    %366 = vmatprep.subr.mxu0 0.0
    %367 = vmatpush1.msra.mxu0 0.0
    %368 = vmatprep.mubr.f32.mxu0 0.0
    %369 = vmatmul.mubr.f32.gmra.mrb[0].mxu0 %v302
    %v370 = vpop.f32.mrb[0].mxu0
    %v371 = vadd.f32 0.0, %v370
    %v372 = vpop.f32.mrb[0].mxu0
    %373 = vdwg.mxu0
    %v375 = vrot.slane %v371, 1
    %v378 = vadd.f32 %v296, %v371
    %v379 = vadd.f32 %v297, %v375
    %v380 = vtanh.pop %v378
    %v381 = vtanh.pop %v379
    %v382 = vmul.f32 %v380, %v158
    %v383 = vmul.f32 %v381, %v158
    %v386 = vrot.slane %v383, 7
    %v387 = vsel %vm165, %v386, %v382
    %v389 = vsel %vm168, %v387, 0.0
    %390 = vadd.xlane.f32.xlu0 %v389
    %v391 = vpop.xlane.xlu0 %390
    %v392 = vld [vmem:[%s0 + $0x3] sm:$0x1]
    %v393 = vld [vmem:[%s0 + $0xb] sm:$0x1]
    %395 = vset.pattern.permute.xlu0 0
    %396 = vperm.xlu0 %395, %v392
    %v397 = vpop.permute.xlu0 %396
    %400 = vset.pattern.permute.xlu0 0
    %401 = vperm.xlu0 %400, %v393
    %v402 = vpop.permute.xlu0 %401
    %v404 = vmul.f32 %v397, %v60
    %v405 = vmul.f32 %v402, %v60
    %v406 = vadd.f32 %v404, %v68
    %v407 = vadd.f32 %v405, %v68
    %v410 = vrot.slane %v381, 7
    %v411 = vsel %vm165, %v410, %v380
    %v412 = vsel %vm72, %v411, 0
    %414 = vmatprep.subr.mxu0 0.0
    %415 = vmatpush1.msra.mxu0 %v38
    %416 = vmatprep.subr.mxu0 0.0
    %417 = vmatpush1.msra.mxu0 %v39
    %418 = vmatprep.subr.mxu0 0.0
    %419 = vmatpush1.msra.mxu0 %v40
    %420 = vmatprep.subr.mxu0 0.0
    %421 = vmatpush1.msra.mxu0 %v41
    %422 = vmatprep.subr.mxu0 0.0
    %423 = vmatpush1.msra.mxu0 0.0
    %424 = vmatprep.subr.mxu0 0.0
    %425 = vmatpush1.msra.mxu0 0.0
    %426 = vmatprep.subr.mxu0 0.0
    %427 = vmatpush1.msra.mxu0 0.0
    %428 = vmatprep.subr.mxu0 0.0
    %429 = vmatpush1.msra.mxu0 0.0
    %430 = vmatprep.subr.mxu0 0.0
    %431 = vmatpush1.msra.mxu0 0.0
    %432 = vmatprep.subr.mxu0 0.0
    %433 = vmatpush1.msra.mxu0 0.0
    %434 = vmatprep.subr.mxu0 0.0
    %435 = vmatpush1.msra.mxu0 0.0
    %436 = vmatprep.subr.mxu0 0.0
    %437 = vmatpush1.msra.mxu0 0.0
    %438 = vmatprep.subr.mxu0 0.0
    %439 = vmatpush1.msra.mxu0 0.0
    %440 = vmatprep.subr.mxu0 0.0
    %441 = vmatpush1.msra.mxu0 0.0
    %442 = vmatprep.subr.mxu0 0.0
    %443 = vmatpush1.msra.mxu0 0.0
    %444 = vmatprep.subr.mxu0 0.0
    %445 = vmatpush1.msra.mxu0 0.0
    %446 = vmatprep.subr.mxu0 0.0
    %447 = vmatpush1.msra.mxu0 0.0
    %448 = vmatprep.subr.mxu0 0.0
    %449 = vmatpush1.msra.mxu0 0.0
    %450 = vmatprep.subr.mxu0 0.0
    %451 = vmatpush1.msra.mxu0 0.0
    %452 = vmatprep.subr.mxu0 0.0
    %453 = vmatpush1.msra.mxu0 0.0
    %454 = vmatprep.subr.mxu0 0.0
    %455 = vmatpush1.msra.mxu0 0.0
    %456 = vmatprep.subr.mxu0 0.0
    %457 = vmatpush1.msra.mxu0 0.0
    %458 = vmatprep.subr.mxu0 0.0
    %459 = vmatpush1.msra.mxu0 0.0
    %460 = vmatprep.subr.mxu0 0.0
    %461 = vmatpush1.msra.mxu0 0.0
    %462 = vmatprep.subr.mxu0 0.0
    %463 = vmatpush1.msra.mxu0 0.0
    %464 = vmatprep.subr.mxu0 0.0
    %465 = vmatpush1.msra.mxu0 0.0
    %466 = vmatprep.subr.mxu0 0.0
    %467 = vmatpush1.msra.mxu0 0.0
    %468 = vmatprep.subr.mxu0 0.0
    %469 = vmatpush1.msra.mxu0 0.0
    %470 = vmatprep.subr.mxu0 0.0
    %471 = vmatpush1.msra.mxu0 0.0
    %472 = vmatprep.subr.mxu0 0.0
    %473 = vmatpush1.msra.mxu0 0.0
    %474 = vmatprep.subr.mxu0 0.0
    %475 = vmatpush1.msra.mxu0 0.0
    %476 = vmatprep.subr.mxu0 0.0
    %477 = vmatpush1.msra.mxu0 0.0
    %478 = vmatprep.mubr.f32.mxu0 0.0
    %479 = vmatmul.mubr.f32.gmra.mrb[0].mxu0 %v412
    %v480 = vpop.f32.mrb[0].mxu0
    %v481 = vadd.f32 0.0, %v480
    %v482 = vpop.f32.mrb[0].mxu0
    %483 = vdwg.mxu0
    %v485 = vrot.slane %v481, 1
    %v488 = vadd.f32 %v406, %v481
    %v489 = vadd.f32 %v407, %v485
    %v490 = vtanh.pop %v488
    %v491 = vtanh.pop %v489
    %v492 = vmul.f32 %v490, %v158
    %v493 = vmul.f32 %v491, %v158
    %v496 = vrot.slane %v493, 7
    %v497 = vsel %vm165, %v496, %v492
    %v499 = vsel %vm168, %v497, 0.0
    %500 = vadd.xlane.f32.xlu0 %v499
    %v501 = vpop.xlane.xlu0 %500
    %v502 = vld [vmem:[%s0 + $0x4] sm:$0x1]
    %v503 = vld [vmem:[%s0 + $0xc] sm:$0x1]
    %505 = vset.pattern.permute.xlu0 0
    %506 = vperm.xlu0 %505, %v502
    %v507 = vpop.permute.xlu0 %506
    %510 = vset.pattern.permute.xlu0 0
    %511 = vperm.xlu0 %510, %v503
    %v512 = vpop.permute.xlu0 %511
    %v514 = vmul.f32 %v507, %v60
    %v515 = vmul.f32 %v512, %v60
    %v516 = vadd.f32 %v514, %v68
    %v517 = vadd.f32 %v515, %v68
    %v520 = vrot.slane %v491, 7
    %v521 = vsel %vm165, %v520, %v490
    %v522 = vsel %vm72, %v521, 0
    %524 = vmatprep.subr.mxu0 0.0
    %525 = vmatpush1.msra.mxu0 %v38
    %526 = vmatprep.subr.mxu0 0.0
    %527 = vmatpush1.msra.mxu0 %v39
    %528 = vmatprep.subr.mxu0 0.0
    %529 = vmatpush1.msra.mxu0 %v40
    %530 = vmatprep.subr.mxu0 0.0
    %531 = vmatpush1.msra.mxu0 %v41
    %532 = vmatprep.subr.mxu0 0.0
    %533 = vmatpush1.msra.mxu0 0.0
    %534 = vmatprep.subr.mxu0 0.0
    %535 = vmatpush1.msra.mxu0 0.0
    %536 = vmatprep.subr.mxu0 0.0
    %537 = vmatpush1.msra.mxu0 0.0
    %538 = vmatprep.subr.mxu0 0.0
    %539 = vmatpush1.msra.mxu0 0.0
    %540 = vmatprep.subr.mxu0 0.0
    %541 = vmatpush1.msra.mxu0 0.0
    %542 = vmatprep.subr.mxu0 0.0
    %543 = vmatpush1.msra.mxu0 0.0
    %544 = vmatprep.subr.mxu0 0.0
    %545 = vmatpush1.msra.mxu0 0.0
    %546 = vmatprep.subr.mxu0 0.0
    %547 = vmatpush1.msra.mxu0 0.0
    %548 = vmatprep.subr.mxu0 0.0
    %549 = vmatpush1.msra.mxu0 0.0
    %550 = vmatprep.subr.mxu0 0.0
    %551 = vmatpush1.msra.mxu0 0.0
    %552 = vmatprep.subr.mxu0 0.0
    %553 = vmatpush1.msra.mxu0 0.0
    %554 = vmatprep.subr.mxu0 0.0
    %555 = vmatpush1.msra.mxu0 0.0
    %556 = vmatprep.subr.mxu0 0.0
    %557 = vmatpush1.msra.mxu0 0.0
    %558 = vmatprep.subr.mxu0 0.0
    %559 = vmatpush1.msra.mxu0 0.0
    %560 = vmatprep.subr.mxu0 0.0
    %561 = vmatpush1.msra.mxu0 0.0
    %562 = vmatprep.subr.mxu0 0.0
    %563 = vmatpush1.msra.mxu0 0.0
    %564 = vmatprep.subr.mxu0 0.0
    %565 = vmatpush1.msra.mxu0 0.0
    %566 = vmatprep.subr.mxu0 0.0
    %567 = vmatpush1.msra.mxu0 0.0
    %568 = vmatprep.subr.mxu0 0.0
    %569 = vmatpush1.msra.mxu0 0.0
    %570 = vmatprep.subr.mxu0 0.0
    %571 = vmatpush1.msra.mxu0 0.0
    %572 = vmatprep.subr.mxu0 0.0
    %573 = vmatpush1.msra.mxu0 0.0
    %574 = vmatprep.subr.mxu0 0.0
    %575 = vmatpush1.msra.mxu0 0.0
    %576 = vmatprep.subr.mxu0 0.0
    %577 = vmatpush1.msra.mxu0 0.0
    %578 = vmatprep.subr.mxu0 0.0
    %579 = vmatpush1.msra.mxu0 0.0
    %580 = vmatprep.subr.mxu0 0.0
    %581 = vmatpush1.msra.mxu0 0.0
    %582 = vmatprep.subr.mxu0 0.0
    %583 = vmatpush1.msra.mxu0 0.0
    %584 = vmatprep.subr.mxu0 0.0
    %585 = vmatpush1.msra.mxu0 0.0
    %586 = vmatprep.subr.mxu0 0.0
    %587 = vmatpush1.msra.mxu0 0.0
    %588 = vmatprep.mubr.f32.mxu0 0.0
    %589 = vmatmul.mubr.f32.gmra.mrb[0].mxu0 %v522
    %v590 = vpop.f32.mrb[0].mxu0
    %v591 = vadd.f32 0.0, %v590
    %v592 = vpop.f32.mrb[0].mxu0
    %593 = vdwg.mxu0
    %v595 = vrot.slane %v591, 1
    %v598 = vadd.f32 %v516, %v591
    %v599 = vadd.f32 %v517, %v595
    %v600 = vtanh.pop %v598
    %v601 = vtanh.pop %v599
    %v602 = vmul.f32 %v600, %v158
    %v603 = vmul.f32 %v601, %v158
    %v606 = vrot.slane %v603, 7
    %v607 = vsel %vm165, %v606, %v602
    %v609 = vsel %vm168, %v607, 0.0
    %610 = vadd.xlane.f32.xlu0 %v609
    %v611 = vpop.xlane.xlu0 %610
    %v612 = vld [vmem:[%s0 + $0x5] sm:$0x1]
    %v613 = vld [vmem:[%s0 + $0xd] sm:$0x1]
    %615 = vset.pattern.permute.xlu0 0
    %616 = vperm.xlu0 %615, %v612
    %v617 = vpop.permute.xlu0 %616
    %620 = vset.pattern.permute.xlu0 0
    %621 = vperm.xlu0 %620, %v613
    %v622 = vpop.permute.xlu0 %621
    %v624 = vmul.f32 %v617, %v60
    %v625 = vmul.f32 %v622, %v60
    %v626 = vadd.f32 %v624, %v68
    %v627 = vadd.f32 %v625, %v68
    %v630 = vrot.slane %v601, 7
    %v631 = vsel %vm165, %v630, %v600
    %v632 = vsel %vm72, %v631, 0
    %634 = vmatprep.subr.mxu0 0.0
    %635 = vmatpush1.msra.mxu0 %v38
    %636 = vmatprep.subr.mxu0 0.0
    %637 = vmatpush1.msra.mxu0 %v39
    %638 = vmatprep.subr.mxu0 0.0
    %639 = vmatpush1.msra.mxu0 %v40
    %640 = vmatprep.subr.mxu0 0.0
    %641 = vmatpush1.msra.mxu0 %v41
    %642 = vmatprep.subr.mxu0 0.0
    %643 = vmatpush1.msra.mxu0 0.0
    %644 = vmatprep.subr.mxu0 0.0
    %645 = vmatpush1.msra.mxu0 0.0
    %646 = vmatprep.subr.mxu0 0.0
    %647 = vmatpush1.msra.mxu0 0.0
    %648 = vmatprep.subr.mxu0 0.0
    %649 = vmatpush1.msra.mxu0 0.0
    %650 = vmatprep.subr.mxu0 0.0
    %651 = vmatpush1.msra.mxu0 0.0
    %652 = vmatprep.subr.mxu0 0.0
    %653 = vmatpush1.msra.mxu0 0.0
    %654 = vmatprep.subr.mxu0 0.0
    %655 = vmatpush1.msra.mxu0 0.0
    %656 = vmatprep.subr.mxu0 0.0
    %657 = vmatpush1.msra.mxu0 0.0
    %658 = vmatprep.subr.mxu0 0.0
    %659 = vmatpush1.msra.mxu0 0.0
    %660 = vmatprep.subr.mxu0 0.0
    %661 = vmatpush1.msra.mxu0 0.0
    %662 = vmatprep.subr.mxu0 0.0
    %663 = vmatpush1.msra.mxu0 0.0
    %664 = vmatprep.subr.mxu0 0.0
    %665 = vmatpush1.msra.mxu0 0.0
    %666 = vmatprep.subr.mxu0 0.0
    %667 = vmatpush1.msra.mxu0 0.0
    %668 = vmatprep.subr.mxu0 0.0
    %669 = vmatpush1.msra.mxu0 0.0
    %670 = vmatprep.subr.mxu0 0.0
    %671 = vmatpush1.msra.mxu0 0.0
    %672 = vmatprep.subr.mxu0 0.0
    %673 = vmatpush1.msra.mxu0 0.0
    %674 = vmatprep.subr.mxu0 0.0
    %675 = vmatpush1.msra.mxu0 0.0
    %676 = vmatprep.subr.mxu0 0.0
    %677 = vmatpush1.msra.mxu0 0.0
    %678 = vmatprep.subr.mxu0 0.0
    %679 = vmatpush1.msra.mxu0 0.0
    %680 = vmatprep.subr.mxu0 0.0
    %681 = vmatpush1.msra.mxu0 0.0
    %682 = vmatprep.subr.mxu0 0.0
    %683 = vmatpush1.msra.mxu0 0.0
    %684 = vmatprep.subr.mxu0 0.0
    %685 = vmatpush1.msra.mxu0 0.0
    %686 = vmatprep.subr.mxu0 0.0
    %687 = vmatpush1.msra.mxu0 0.0
    %688 = vmatprep.subr.mxu0 0.0
    %689 = vmatpush1.msra.mxu0 0.0
    %690 = vmatprep.subr.mxu0 0.0
    %691 = vmatpush1.msra.mxu0 0.0
    %692 = vmatprep.subr.mxu0 0.0
    %693 = vmatpush1.msra.mxu0 0.0
    %694 = vmatprep.subr.mxu0 0.0
    %695 = vmatpush1.msra.mxu0 0.0
    %696 = vmatprep.subr.mxu0 0.0
    %697 = vmatpush1.msra.mxu0 0.0
    %698 = vmatprep.mubr.f32.mxu0 0.0
    %699 = vmatmul.mubr.f32.gmra.mrb[0].mxu0 %v632
    %v700 = vpop.f32.mrb[0].mxu0
    %v701 = vadd.f32 0.0, %v700
    %v702 = vpop.f32.mrb[0].mxu0
    %703 = vdwg.mxu0
    %v705 = vrot.slane %v701, 1
    %v708 = vadd.f32 %v626, %v701
    %v709 = vadd.f32 %v627, %v705
    %v710 = vtanh.pop %v708
    %v711 = vtanh.pop %v709
    %v712 = vmul.f32 %v710, %v158
    %v713 = vmul.f32 %v711, %v158
    %v716 = vrot.slane %v713, 7
    %v717 = vsel %vm165, %v716, %v712
    %v719 = vsel %vm168, %v717, 0.0
    %720 = vadd.xlane.f32.xlu0 %v719
    %v721 = vpop.xlane.xlu0 %720
    %v722 = vld [vmem:[%s0 + $0x6] sm:$0x1]
    %v723 = vld [vmem:[%s0 + $0xe] sm:$0x1]
    %725 = vset.pattern.permute.xlu0 0
    %726 = vperm.xlu0 %725, %v722
    %v727 = vpop.permute.xlu0 %726
    %730 = vset.pattern.permute.xlu0 0
    %731 = vperm.xlu0 %730, %v723
    %v732 = vpop.permute.xlu0 %731
    %v734 = vmul.f32 %v727, %v60
    %v735 = vmul.f32 %v732, %v60
    %v736 = vadd.f32 %v734, %v68
    %v737 = vadd.f32 %v735, %v68
    %v740 = vrot.slane %v711, 7
    %v741 = vsel %vm165, %v740, %v710
    %v742 = vsel %vm72, %v741, 0
    %744 = vmatprep.subr.mxu0 0.0
    %745 = vmatpush1.msra.mxu0 %v38
    %746 = vmatprep.subr.mxu0 0.0
    %747 = vmatpush1.msra.mxu0 %v39
    %748 = vmatprep.subr.mxu0 0.0
    %749 = vmatpush1.msra.mxu0 %v40
    %750 = vmatprep.subr.mxu0 0.0
    %751 = vmatpush1.msra.mxu0 %v41
    %752 = vmatprep.subr.mxu0 0.0
    %753 = vmatpush1.msra.mxu0 0.0
    %754 = vmatprep.subr.mxu0 0.0
    %755 = vmatpush1.msra.mxu0 0.0
    %756 = vmatprep.subr.mxu0 0.0
    %757 = vmatpush1.msra.mxu0 0.0
    %758 = vmatprep.subr.mxu0 0.0
    %759 = vmatpush1.msra.mxu0 0.0
    %760 = vmatprep.subr.mxu0 0.0
    %761 = vmatpush1.msra.mxu0 0.0
    %762 = vmatprep.subr.mxu0 0.0
    %763 = vmatpush1.msra.mxu0 0.0
    %764 = vmatprep.subr.mxu0 0.0
    %765 = vmatpush1.msra.mxu0 0.0
    %766 = vmatprep.subr.mxu0 0.0
    %767 = vmatpush1.msra.mxu0 0.0
    %768 = vmatprep.subr.mxu0 0.0
    %769 = vmatpush1.msra.mxu0 0.0
    %770 = vmatprep.subr.mxu0 0.0
    %771 = vmatpush1.msra.mxu0 0.0
    %772 = vmatprep.subr.mxu0 0.0
    %773 = vmatpush1.msra.mxu0 0.0
    %774 = vmatprep.subr.mxu0 0.0
    %775 = vmatpush1.msra.mxu0 0.0
    %776 = vmatprep.subr.mxu0 0.0
    %777 = vmatpush1.msra.mxu0 0.0
    %778 = vmatprep.subr.mxu0 0.0
    %779 = vmatpush1.msra.mxu0 0.0
    %780 = vmatprep.subr.mxu0 0.0
    %781 = vmatpush1.msra.mxu0 0.0
    %782 = vmatprep.subr.mxu0 0.0
    %783 = vmatpush1.msra.mxu0 0.0
    %784 = vmatprep.subr.mxu0 0.0
    %785 = vmatpush1.msra.mxu0 0.0
    %786 = vmatprep.subr.mxu0 0.0
    %787 = vmatpush1.msra.mxu0 0.0
    %788 = vmatprep.subr.mxu0 0.0
    %789 = vmatpush1.msra.mxu0 0.0
    %790 = vmatprep.subr.mxu0 0.0
    %791 = vmatpush1.msra.mxu0 0.0
    %792 = vmatprep.subr.mxu0 0.0
    %793 = vmatpush1.msra.mxu0 0.0
    %794 = vmatprep.subr.mxu0 0.0
    %795 = vmatpush1.msra.mxu0 0.0
    %796 = vmatprep.subr.mxu0 0.0
    %797 = vmatpush1.msra.mxu0 0.0
    %798 = vmatprep.subr.mxu0 0.0
    %799 = vmatpush1.msra.mxu0 0.0
    %800 = vmatprep.subr.mxu0 0.0
    %801 = vmatpush1.msra.mxu0 0.0
    %802 = vmatprep.subr.mxu0 0.0
    %803 = vmatpush1.msra.mxu0 0.0
    %804 = vmatprep.subr.mxu0 0.0
    %805 = vmatpush1.msra.mxu0 0.0
    %806 = vmatprep.subr.mxu0 0.0
    %807 = vmatpush1.msra.mxu0 0.0
    %808 = vmatprep.mubr.f32.mxu0 0.0
    %809 = vmatmul.mubr.f32.gmra.mrb[0].mxu0 %v742
    %v810 = vpop.f32.mrb[0].mxu0
    %v811 = vadd.f32 0.0, %v810
    %v812 = vpop.f32.mrb[0].mxu0
    %813 = vdwg.mxu0
    %v815 = vrot.slane %v811, 1
    %v818 = vadd.f32 %v736, %v811
    %v819 = vadd.f32 %v737, %v815
    %v820 = vtanh.pop %v818
    %v821 = vtanh.pop %v819
    %v822 = vmul.f32 %v820, %v158
    %v823 = vmul.f32 %v821, %v158
    %v826 = vrot.slane %v823, 7
    %v827 = vsel %vm165, %v826, %v822
    %v829 = vsel %vm168, %v827, 0.0
    %830 = vadd.xlane.f32.xlu0 %v829
    %v831 = vpop.xlane.xlu0 %830
    %v832 = vld [vmem:[%s0 + $0x7] sm:$0x1]
    %v833 = vld [vmem:[%s0 + $0xf] sm:$0x1]
    %835 = vset.pattern.permute.xlu0 0
    %836 = vperm.xlu0 %835, %v832
    %v837 = vpop.permute.xlu0 %836
    %840 = vset.pattern.permute.xlu0 0
    %841 = vperm.xlu0 %840, %v833
    %v842 = vpop.permute.xlu0 %841
    %v844 = vmul.f32 %v837, %v60
    %v845 = vmul.f32 %v842, %v60
    %v846 = vadd.f32 %v844, %v68
    %v847 = vadd.f32 %v845, %v68
    %v850 = vrot.slane %v821, 7
    %v851 = vsel %vm165, %v850, %v820
    %v852 = vsel %vm72, %v851, 0
    %854 = vmatprep.subr.mxu0 0.0
    %855 = vmatpush1.msra.mxu0 %v38
    %856 = vmatprep.subr.mxu0 0.0
    %857 = vmatpush1.msra.mxu0 %v39
    %858 = vmatprep.subr.mxu0 0.0
    %859 = vmatpush1.msra.mxu0 %v40
    %860 = vmatprep.subr.mxu0 0.0
    %861 = vmatpush1.msra.mxu0 %v41
    %862 = vmatprep.subr.mxu0 0.0
    %863 = vmatpush1.msra.mxu0 0.0
    %864 = vmatprep.subr.mxu0 0.0
    %865 = vmatpush1.msra.mxu0 0.0
    %866 = vmatprep.subr.mxu0 0.0
    %867 = vmatpush1.msra.mxu0 0.0
    %868 = vmatprep.subr.mxu0 0.0
    %869 = vmatpush1.msra.mxu0 0.0
    %870 = vmatprep.subr.mxu0 0.0
    %871 = vmatpush1.msra.mxu0 0.0
    %872 = vmatprep.subr.mxu0 0.0
    %873 = vmatpush1.msra.mxu0 0.0
    %874 = vmatprep.subr.mxu0 0.0
    %875 = vmatpush1.msra.mxu0 0.0
    %876 = vmatprep.subr.mxu0 0.0
    %877 = vmatpush1.msra.mxu0 0.0
    %878 = vmatprep.subr.mxu0 0.0
    %879 = vmatpush1.msra.mxu0 0.0
    %880 = vmatprep.subr.mxu0 0.0
    %881 = vmatpush1.msra.mxu0 0.0
    %882 = vmatprep.subr.mxu0 0.0
    %883 = vmatpush1.msra.mxu0 0.0
    %884 = vmatprep.subr.mxu0 0.0
    %885 = vmatpush1.msra.mxu0 0.0
    %886 = vmatprep.subr.mxu0 0.0
    %887 = vmatpush1.msra.mxu0 0.0
    %888 = vmatprep.subr.mxu0 0.0
    %889 = vmatpush1.msra.mxu0 0.0
    %890 = vmatprep.subr.mxu0 0.0
    %891 = vmatpush1.msra.mxu0 0.0
    %892 = vmatprep.subr.mxu0 0.0
    %893 = vmatpush1.msra.mxu0 0.0
    %894 = vmatprep.subr.mxu0 0.0
    %895 = vmatpush1.msra.mxu0 0.0
    %896 = vmatprep.subr.mxu0 0.0
    %897 = vmatpush1.msra.mxu0 0.0
    %898 = vmatprep.subr.mxu0 0.0
    %899 = vmatpush1.msra.mxu0 0.0
    %900 = vmatprep.subr.mxu0 0.0
    %901 = vmatpush1.msra.mxu0 0.0
    %902 = vmatprep.subr.mxu0 0.0
    %903 = vmatpush1.msra.mxu0 0.0
    %904 = vmatprep.subr.mxu0 0.0
    %905 = vmatpush1.msra.mxu0 0.0
    %906 = vmatprep.subr.mxu0 0.0
    %907 = vmatpush1.msra.mxu0 0.0
    %908 = vmatprep.subr.mxu0 0.0
    %909 = vmatpush1.msra.mxu0 0.0
    %910 = vmatprep.subr.mxu0 0.0
    %911 = vmatpush1.msra.mxu0 0.0
    %912 = vmatprep.subr.mxu0 0.0
    %913 = vmatpush1.msra.mxu0 0.0
    %914 = vmatprep.subr.mxu0 0.0
    %915 = vmatpush1.msra.mxu0 0.0
    %916 = vmatprep.subr.mxu0 0.0
    %917 = vmatpush1.msra.mxu0 0.0
    %918 = vmatprep.mubr.f32.mxu0 0.0
    %919 = vmatmul.mubr.f32.gmra.mrb[0].mxu0 %v852
    %v920 = vpop.f32.mrb[0].mxu0
    %v921 = vadd.f32 0.0, %v920
    %v922 = vpop.f32.mrb[0].mxu0
    %923 = vdwg.mxu0
    %v925 = vrot.slane %v921, 1
    %v928 = vadd.f32 %v846, %v921
    %v929 = vadd.f32 %v847, %v925
    %v930 = vtanh.pop %v928
    %v931 = vtanh.pop %v929
    %v932 = vmul.f32 %v930, %v158
    %v933 = vmul.f32 %v931, %v158
    %v936 = vrot.slane %v933, 7
    %v937 = vsel %vm165, %v936, %v932
    %v939 = vsel %vm168, %v937, 0.0
    %940 = vadd.xlane.f32.xlu0 %v939
    %v941 = vpop.xlane.xlu0 %940
    %v944 = vrot.slane %v931, 7
    %v945 = vsel %vm165, %v944, %v930
    %947 = vst.msk [vmem:[#allocation5] sm:$0x3] %vm168, %v945
    %vm948 = vcmask 7168
    %v949 = vsel %vm948, %v171, %v281
    %vm950 = vcmask 15360
    %v951 = vsel %vm950, %v949, %v391
    %vm952 = vcmask 23552
    %v953 = vsel %vm952, %v951, %v501
    %vm954 = vcmask 31744
    %v955 = vsel %vm954, %v953, %v611
    %vm956 = vcmask 39936
    %v957 = vsel %vm956, %v955, %v721
    %vm958 = vcmask 48128
    %v959 = vsel %vm958, %v957, %v831
    %vm960 = vcmask 56320
    %v961 = vsel %vm960, %v959, %v941
    %s962 = sld [smem:[#allocation2]]
    %v963 = vstv %s962
    %v964 = vadd.f32 %v961, %v963
    %vm965 = vcmask 58368
    %966 = vst.msk [vmem:[#allocation3] sm:$0x3] %vm965, %v964
    // Predicated region
    $region34: #{rnn_forward.1} parent=1 // pred_check
      _
    $region35: #{rnn_forward.1} parent=1 // pred_check_branch
      %968 = sbr.rel (0) target = $region37
    $region36: #{rnn_forward.1} parent=1 // pred_region
      %s970 = ssub.s32 32, 32
      %971 = vsyncadd [#allocation4], %s970
      %s973 = sshll.u32 [#allocation3], 4
      %s974 = int_to_ptr.vmem [resolvable:$true] %s973
      %976 = dma.vmem_to_hbm [thread:$0]  %s974, 32, %s8, [#allocation4]
    $region37: #{rnn_forward.1} parent=1 // pred_fallthru
      _
    // Predicated region
    $region38: #{rnn_forward.1} parent=1 // pred_check
      _
    $region39: #{rnn_forward.1} parent=1 // pred_check_branch
      %978 = sbr.rel (0) target = $region41
    $region40: #{rnn_forward.1} parent=1 // pred_region
      %s980 = ssub.s32 32, 32
      %981 = vsyncadd [#allocation6], %s980
      %s983 = sshll.u32 [#allocation5], 4
      %s984 = int_to_ptr.vmem [resolvable:$true] %s983
      %986 = dma.vmem_to_hbm [thread:$0]  %s984, 32, %s9, [#allocation6]
    $region41: #{rnn_forward.1} parent=1 // pred_fallthru
      _
    // Predicated region
    $region42: #{rnn_forward.1} parent=1 // pred_check
      _
    $region43: #{rnn_forward.1} parent=1 // pred_check_branch
      %988 = sbr.rel (0) target = $region45
    $region44: #{rnn_forward.1} parent=1 // pred_region
      %989 = dma.done [#allocation4], 32
    $region45: #{rnn_forward.1} parent=1 // pred_fallthru
      _
    // Predicated region
    $region46: #{rnn_forward.1} parent=1 // pred_check
      _
    $region47: #{rnn_forward.1} parent=1 // pred_check_branch
      %991 = sbr.rel (0) target = $region49
    $region48: #{rnn_forward.1} parent=1 // pred_region
      %992 = dma.done [#allocation6], 32
    $region49: #{rnn_forward.1} parent=1 // pred_fallthru
      _
    %993 = vsyncpa [#allocation4], 1
    %994 = vsyncpa [#allocation6], 1

</llo_original>
